<compile_context>
chip_gen: v7x
topology: tpu7x:2x2x1
jax: 0.10.0
libtpu: 0.0.40
codegen_flags: <defaults>
</compile_context>

<pallas_src>
import functools

import jax
import jax.numpy as jnp
from jax.experimental import pallas as pl
from jax.experimental.pallas import tpu as pltpu


def _round_up(x, m):
    return (x + m - 1) // m * m


def _encoder_kernel(x_ref, w1_ref, w2_ref, bias_ref, out_ref, *, hp2, lp):
    """Fused loc/scale MLP.

    x_ref   : (TILE_B, Dp)
    w1_ref  : (Dp, 2*Hp)        columns [0:Hp]=loc, [Hp:2Hp]=scale
    w2_ref  : (2*Hp, 2*Lp)      block-diagonal (loc block top-left, scale bottom-right)
    bias_ref: (1, 2*Hp + 2*Lp)  [b1_loc | b1_scale | b2_loc | b2_scale] (padded)
    out_ref : (TILE_B, 2*Lp)    [loc | scale] lane-dense slab
    """
    x = x_ref[...]
    b1 = bias_ref[0:1, :hp2]      # (1, 2*Hp), f32
    b2 = bias_ref[0:1, hp2:]      # (1, 2*Lp), f32

    # Layer 1 (both networks fused along output lanes), f32 accumulation on MXU.
    h = jnp.dot(x, w1_ref[...], preferred_element_type=jnp.float32) + b1
    h = jnp.maximum(h, 0.0)       # VPU math stays f32 (v5e has no bf16 VALU)

    # Layer 2: block-diagonal fused weights -> single [TILE_B, 2*Lp] result.
    out = jnp.dot(h.astype(w2_ref.dtype), w2_ref[...],
                  preferred_element_type=jnp.float32) + b2

    # abs() only on the scale half (lanes >= Lp).
    lane = jax.lax.broadcasted_iota(jnp.int32, out.shape, 1)
    out = jnp.where(lane >= lp, jnp.abs(out), out)

    out_ref[...] = out.astype(out_ref.dtype)


def encoder_forward(x, params, *, compute_dtype=jnp.float32, max_tile_b=128):
    """x: [B, observed_dim] float32. Returns (loc, scale) each [B, latent_dim] float32."""
    B, D = x.shape
    H = params["w1_loc"].shape[1]
    L = params["w2_loc"].shape[1]

    Dp = _round_up(D, 128)                 # lane-pad observed dim
    Hp = _round_up(H, 128)                 # lane-pad hidden dim
    Lp = _round_up(max(L, 1), 64)          # 2*Lp is a multiple of 128 -> lane-dense output

    tile_b = min(max_tile_b, _round_up(B, 8))
    Bp = _round_up(B, tile_b)

    f32 = jnp.float32

    # ---- wrapper-side packing & zero-padding (free layout plumbing) ----
    w1 = jnp.zeros((Dp, 2 * Hp), f32)
    w1 = w1.at[:D, :H].set(params["w1_loc"].astype(f32))
    w1 = w1.at[:D, Hp:Hp + H].set(params["w1_scale"].astype(f32))

    w2 = jnp.zeros((2 * Hp, 2 * Lp), f32)                      # block-diagonal
    w2 = w2.at[:H, :L].set(params["w2_loc"].astype(f32))
    w2 = w2.at[Hp:Hp + H, Lp:Lp + L].set(params["w2_scale"].astype(f32))

    bias = jnp.zeros((1, 2 * Hp + 2 * Lp), f32)                # one slab -> one DMA
    bias = bias.at[0, :H].set(params["b1_loc"].reshape(-1).astype(f32))
    bias = bias.at[0, Hp:Hp + H].set(params["b1_scale"].reshape(-1).astype(f32))
    bias = bias.at[0, 2 * Hp:2 * Hp + L].set(params["b2_loc"].reshape(-1).astype(f32))
    bias = bias.at[0, 2 * Hp + Lp:2 * Hp + Lp + L].set(params["b2_scale"].reshape(-1).astype(f32))

    xp = jnp.zeros((Bp, Dp), f32).at[:B, :D].set(x.astype(f32))

    # Matmul operands may be bf16 (v6e/v7x); accumulation stays f32 in the kernel.
    xp = xp.astype(compute_dtype)
    w1 = w1.astype(compute_dtype)
    w2 = w2.astype(compute_dtype)

    kernel = functools.partial(_encoder_kernel, hp2=2 * Hp, lp=Lp)

    out = pl.pallas_call(
        kernel,
        out_shape=jax.ShapeDtypeStruct((Bp, 2 * Lp), jnp.float32),
        grid=(Bp // tile_b,),
        in_specs=[
            pl.BlockSpec((tile_b, Dp), lambda i: (i, 0)),           # activation stream
            pl.BlockSpec((Dp, 2 * Hp), lambda i: (0, 0)),           # weights: VMEM-resident
            pl.BlockSpec((2 * Hp, 2 * Lp), lambda i: (0, 0)),       # weights: VMEM-resident
            pl.BlockSpec((1, 2 * Hp + 2 * Lp), lambda i: (0, 0)),   # packed biases
        ],
        out_specs=pl.BlockSpec((tile_b, 2 * Lp), lambda i: (i, 0)),
        compiler_params=pltpu.CompilerParams(
            dimension_semantics=("parallel",),   # v7x: split batch tiles across both TCs
        ),
    )(xp, w1, w2, bias)

    loc = out[:B, :L]
    scale = out[:B, Lp:Lp + L]
    return loc, scale


def init_params(key, observed_dim, hidden_dim, latent_dim):
    ks = jax.random.split(key, 8)

    def lin(kw, kb, din, dout):
        w = jax.random.normal(kw, (din, dout), jnp.float32) * (1.0 / jnp.sqrt(din))
        b = jax.random.normal(kb, (1, dout), jnp.float32) * 0.01
        return w, b

    w1l, b1l = lin(ks[0], ks[1], observed_dim, hidden_dim)
    w2l, b2l = lin(ks[2], ks[3], hidden_dim, latent_dim)
    w1s, b1s = lin(ks[4], ks[5], observed_dim, hidden_dim)
    w2s, b2s = lin(ks[6], ks[7], hidden_dim, latent_dim)
    return dict(w1_loc=w1l, b1_loc=b1l, w2_loc=w2l, b2_loc=b2l,
                w1_scale=w1s, b1_scale=b1s, w2_scale=w2s, b2_scale=b2s)


def _reference(x, p):
    h = jnp.maximum(x @ p["w1_loc"] + p["b1_loc"], 0.0)
    loc = h @ p["w2_loc"] + p["b2_loc"]
    h = jnp.maximum(x @ p["w1_scale"] + p["b1_scale"], 0.0)
    scale = jnp.abs(h @ p["w2_scale"] + p["b2_scale"])
    return loc, scale


if __name__ == "__main__":
    key = jax.random.PRNGKey(0)
    k_x, k_p, k_x2 = jax.random.split(key, 3)

    batch, observed_dim, hidden_dim, latent_dim = 8, 32, 32, 8
    x = jax.random.normal(k_x, (batch, observed_dim), jnp.float32)
    params = init_params(k_p, observed_dim, hidden_dim, latent_dim)

    # --- f32 path (exact) ---
    loc, scale = encoder_forward(x, params)
    jax.block_until_ready((loc, scale))
    ref_loc, ref_scale = _reference(x, params)
    assert loc.shape == (batch, latent_dim) and scale.shape == (batch, latent_dim)
    assert jnp.allclose(loc, ref_loc, atol=1e-5, rtol=1e-5)
    assert jnp.allclose(scale, ref_scale, atol=1e-5, rtol=1e-5)
    assert bool(jnp.all(scale >= 0.0))

    # --- multi-tile batch grid (exercises batch padding + pipelining) ---
    x2 = jax.random.normal(k_x2, (20, observed_dim), jnp.float32)
    loc2, scale2 = encoder_forward(x2, params, max_tile_b=8)
    jax.block_until_ready((loc2, scale2))
    r_loc2, r_scale2 = _reference(x2, params)
    assert jnp.allclose(loc2, r_loc2, atol=1e-5, rtol=1e-5)
    assert jnp.allclose(scale2, r_scale2, atol=1e-5, rtol=1e-5)

    # --- bf16 matmul operands (v6e/v7x fast path), f32 accumulation ---
    loc_b, scale_b = encoder_forward(x, params, compute_dtype=jnp.bfloat16)
    jax.block_until_ready((loc_b, scale_b))
    assert jnp.allclose(loc_b, ref_loc, atol=5e-2, rtol=5e-2)
    assert jnp.allclose(scale_b, ref_scale, atol=5e-2, rtol=5e-2)
    assert bool(jnp.all(scale_b >= 0.0))

    print("KERNEL_OK")
</pallas_src>

<mosaic_0001>
module attributes {stable_mosaic.version = 11 : i64} {
  func.func @_encoder_kernel(%arg0: i32, %arg1: memref<8x128xf32, #tpu.memory_space<vmem>>, %arg2: memref<128x256xf32, #tpu.memory_space<vmem>>, %arg3: memref<256x128xf32, #tpu.memory_space<vmem>>, %arg4: memref<1x384xf32, #tpu.memory_space<vmem>>, %arg5: memref<8x128xf32, #tpu.memory_space<vmem>>) attributes {dimension_semantics = [#tpu.dimension_semantics<parallel>], iteration_bounds = array<i64: 1>, scalar_prefetch = 0 : i64, scratch_operands = 0 : i64, tpu.core_type = #tpu.core_type<tc>, window_params = [{transform_indices = @transform_0, window_bounds = array<i64: 8, 128>}, {pipeline_mode = #tpu.pipeline_mode<synchronous>, transform_indices = @transform_1, window_bounds = array<i64: 128, 256>}, {pipeline_mode = #tpu.pipeline_mode<synchronous>, transform_indices = @transform_2, window_bounds = array<i64: 256, 128>}, {pipeline_mode = #tpu.pipeline_mode<synchronous>, transform_indices = @transform_3, window_bounds = array<i64: 1, 384>}, {transform_indices = @transform_4, window_bounds = array<i64: 8, 128>}]} {
    %c0 = arith.constant 0 : index
    %c0_0 = arith.constant 0 : index
    %0 = vector.load %arg1[%c0, %c0_0] : memref<8x128xf32, #tpu.memory_space<vmem>>, vector<8x128xf32>
    %c0_1 = arith.constant 0 : index
    %c0_2 = arith.constant 0 : index
    %1 = vector.load %arg4[%c0_1, %c0_2] : memref<1x384xf32, #tpu.memory_space<vmem>>, vector<1x256xf32>
    %c0_3 = arith.constant 0 : index
    %c256 = arith.constant 256 : index
    %2 = vector.load %arg4[%c0_3, %c256] : memref<1x384xf32, #tpu.memory_space<vmem>>, vector<1x128xf32>
    %c0_4 = arith.constant 0 : index
    %c0_5 = arith.constant 0 : index
    %3 = vector.load %arg2[%c0_4, %c0_5] : memref<128x256xf32, #tpu.memory_space<vmem>>, vector<128x256xf32>
    %cst = arith.constant dense<0.000000e+00> : vector<8x256xf32>
    %4 = tpu.matmul %0, %3, %cst {dimension_numbers = #tpu.dot_dimension_numbers<[1], [0], [0], [1], [0, 0, 1, 1], [], []>} : vector<8x128xf32>, vector<128x256xf32>, vector<8x256xf32> -> vector<8x256xf32>
    %5 = vector.broadcast %1 : vector<1x256xf32> to vector<8x256xf32>
    %6 = arith.addf %4, %5 : vector<8x256xf32>
    %cst_6 = arith.constant 0.000000e+00 : f32
    %7 = vector.broadcast %cst_6 : f32 to vector<8x256xf32>
    %8 = arith.maximumf %6, %7 : vector<8x256xf32>
    %c0_7 = arith.constant 0 : index
    %c0_8 = arith.constant 0 : index
    %9 = vector.load %arg3[%c0_7, %c0_8] : memref<256x128xf32, #tpu.memory_space<vmem>>, vector<256x128xf32>
    %cst_9 = arith.constant dense<0.000000e+00> : vector<8x128xf32>
    %10 = tpu.matmul %8, %9, %cst_9 {dimension_numbers = #tpu.dot_dimension_numbers<[1], [0], [0], [1], [0, 0, 1, 1], [], []>} : vector<8x256xf32>, vector<256x128xf32>, vector<8x128xf32> -> vector<8x128xf32>
    %11 = vector.broadcast %2 : vector<1x128xf32> to vector<8x128xf32>
    %12 = arith.addf %10, %11 : vector<8x128xf32>
    %13 = tpu.iota {dimensions = array<i32: 1>} : vector<8x128xi32>
    %c64_i32 = arith.constant 64 : i32
    %14 = vector.broadcast %c64_i32 : i32 to vector<8x128xi32>
    %15 = arith.cmpi sge, %13, %14 : vector<8x128xi32>
    %16 = math.absf %12 : vector<8x128xf32>
    %17 = arith.select %15, %16, %12 : vector<8x128xi1>, vector<8x128xf32>
    %c0_10 = arith.constant 0 : index
    %c0_11 = arith.constant 0 : index
    %18 = vector.load %arg5[%c0_10, %c0_11] : memref<8x128xf32, #tpu.memory_space<vmem>>, vector<8x128xf32>
    tpu.vector_store %arg5[%c0_10, %c0_11], %17 {strides = array<i32>} : memref<8x128xf32, #tpu.memory_space<vmem>>, vector<8x128xf32>,
    return
  }
  func.func @transform_0(%arg0: i32) -> (i32, i32) {
    %c0_i32 = arith.constant 0 : i32
    %c0_i32_0 = arith.constant 0 : i32
    return %arg0, %c0_i32 : i32, i32
  }
  func.func @transform_1(%arg0: i32) -> (i32, i32) {
    %c0_i32 = arith.constant 0 : i32
    %c0_i32_0 = arith.constant 0 : i32
    %c0_i32_1 = arith.constant 0 : i32
    return %c0_i32, %c0_i32_0 : i32, i32
  }
  func.func @transform_2(%arg0: i32) -> (i32, i32) {
    %c0_i32 = arith.constant 0 : i32
    %c0_i32_0 = arith.constant 0 : i32
    %c0_i32_1 = arith.constant 0 : i32
    return %c0_i32, %c0_i32_0 : i32, i32
  }
  func.func @transform_3(%arg0: i32) -> (i32, i32) {
    %c0_i32 = arith.constant 0 : i32
    %c0_i32_0 = arith.constant 0 : i32
    %c0_i32_1 = arith.constant 0 : i32
    return %c0_i32, %c0_i32_0 : i32, i32
  }
  func.func @transform_4(%arg0: i32) -> (i32, i32) {
    %c0_i32 = arith.constant 0 : i32
    %c0_i32_0 = arith.constant 0 : i32
    return %arg0, %c0_i32 : i32, i32
  }
}

</mosaic_0001>

<llo_original>
// kernel: tpu_custom_call.1
$region0: #{tpu_custom_call.1}
  #allocation0 [shape = 'u32[]', space=smem, size = 0x4, offset = 0x4, fixed_abs, tag = 'smem constant byte address 0x4 - core index']
  #allocation1 [shape = 'u32[144,128]{1,0:T(1,128)}', space=vmem, size = 0x12000, scoped, tag = 'internal scratch']
  %s0 = inlined_call_operand.hbm [shape: f32[8,128], index: 0, kind: input, shape index: {}]
  %s1 = inlined_call_operand.hbm [shape: f32[128,256], index: 1, kind: input, shape index: {}]
  %s2 = inlined_call_operand.hbm [shape: f32[256,128], index: 2, kind: input, shape index: {}]
  %s3 = inlined_call_operand.vmem [shape: f32[1,384], index: 3, kind: input, shape index: {}]
  %s4 = inlined_call_operand.hbm [shape: f32[8,128], index: 4, kind: output, shape index: {}]
  %s5 = sld [smem:[#allocation0]]
  $region38: #{tpu_custom_call.1} parent=0
    _
  %s7 = ssub.s32 1, %s5
  %s8 = scalar_select 0, %s7, %s5
  $region1: #{tpu_custom_call.1} parent=0
    #allocation2 [shape = 'u8[4096]{0}', space=vmem, size = 0x1000, scoped, tag = 'input window, operand 0, single buffered']
    #allocation3 [shape = 's32[1]{0}', space=sflag, size = 0x4, scoped, tag = 'scoped memory for tpu_custom_call.1']
    #allocation4 [shape = 's32[1]{0}', space=sflag, size = 0x4, scoped, tag = 'scoped memory for tpu_custom_call.1']
    #allocation5 [shape = 'u8[131072]{0}', space=vmem, size = 0x20000, scoped, tag = 'input window, operand 1, single buffered']
    #allocation6 [shape = 's32[1]{0}', space=sflag, size = 0x4, scoped, tag = 'scoped memory for tpu_custom_call.1']
    #allocation7 [shape = 'u8[131072]{0}', space=vmem, size = 0x20000, scoped, tag = 'input window, operand 2, single buffered']
    #allocation8 [shape = 'u8[4096]{0}', space=vmem, size = 0x1000, scoped, tag = 'output window, operand 0, single buffered']
    %9 = vsyncpa [#allocation3], 0
    %10 = vsyncpa [#allocation6], 0
    %11 = vsyncpa [#allocation4], 0
    // Predicated region
    $region2: #{tpu_custom_call.1} parent=1 // pred_check
      _
    $region3: #{tpu_custom_call.1} parent=1 // pred_check_branch
      %13 = sbr.rel (0) target = $region5
    $region4: #{tpu_custom_call.1} parent=1 // pred_region
      %s15 = ssub.s32 128, 128
      %16 = vsyncadd [#allocation3], %s15
      %s18 = sshll.u32 [#allocation2], 4
      %s19 = int_to_ptr.vmem [resolvable:$true] %s18
      %21 = dma.hbm_to_vmem [thread:$0]  %s0, 128, %s19, [#allocation3]
    $region5: #{tpu_custom_call.1} parent=1 // pred_fallthru
      _
    // Predicated region
    $region6: #{tpu_custom_call.1} parent=1 // pred_check
      _
    $region7: #{tpu_custom_call.1} parent=1 // pred_check_branch
      %23 = sbr.rel (0) target = $region9
    $region8: #{tpu_custom_call.1} parent=1 // pred_region
      %s25 = ssub.s32 4096, 4096
      %26 = vsyncadd [#allocation6], %s25
      %s27 = sshll.u32 [#allocation5], 4
      %s28 = int_to_ptr.vmem [resolvable:$true] %s27
      %33 = dma.hbm_to_vmem [thread:$0]  %s1, 4096, %s28, [#allocation6], 256, 256, 16
    $region9: #{tpu_custom_call.1} parent=1 // pred_fallthru
      _
    // Predicated region
    $region10: #{tpu_custom_call.1} parent=1 // pred_check
      _
    $region11: #{tpu_custom_call.1} parent=1 // pred_check_branch
      %35 = sbr.rel (0) target = $region13
    $region12: #{tpu_custom_call.1} parent=1 // pred_region
      %s37 = ssub.s32 4096, 4096
      %38 = vsyncadd [#allocation6], %s37
      %s39 = sshll.u32 [#allocation7], 4
      %s40 = int_to_ptr.vmem [resolvable:$true] %s39
      %45 = dma.hbm_to_vmem [thread:$0]  %s2, 4096, %s40, [#allocation6], 128, 128, 8
    $region13: #{tpu_custom_call.1} parent=1 // pred_fallthru
      _
    // Predicated region
    $region14: #{tpu_custom_call.1} parent=1 // pred_check
      _
    $region15: #{tpu_custom_call.1} parent=1 // pred_check_branch
      %47 = sbr.rel (0) target = $region17
    $region16: #{tpu_custom_call.1} parent=1 // pred_region
      _
    $region17: #{tpu_custom_call.1} parent=1 // pred_fallthru
      _
    // Predicated region
    $region18: #{tpu_custom_call.1} parent=1 // pred_check
      _
    $region19: #{tpu_custom_call.1} parent=1 // pred_check_branch
      %49 = sbr.rel (0) target = $region21
    $region20: #{tpu_custom_call.1} parent=1 // pred_region
      %50 = dma.done [#allocation3], 128
    $region21: #{tpu_custom_call.1} parent=1 // pred_fallthru
      _
    // Predicated region
    $region22: #{tpu_custom_call.1} parent=1 // pred_check
      _
    $region23: #{tpu_custom_call.1} parent=1 // pred_check_branch
      %52 = sbr.rel (0) target = $region25
    $region24: #{tpu_custom_call.1} parent=1 // pred_region
      %53 = dma.done [#allocation6], 4096
    $region25: #{tpu_custom_call.1} parent=1 // pred_fallthru
      _
    // Predicated region
    $region26: #{tpu_custom_call.1} parent=1 // pred_check
      _
    $region27: #{tpu_custom_call.1} parent=1 // pred_check_branch
      %55 = sbr.rel (0) target = $region29
    $region28: #{tpu_custom_call.1} parent=1 // pred_region
      %56 = dma.done [#allocation6], 4096
    $region29: #{tpu_custom_call.1} parent=1 // pred_fallthru
      _
    %v57 = vld [vmem:[#allocation2] sm:$0xff]
    %v58 = vld [vmem:[%s3] sm:$0x3]
    %v59 = vld [vmem:[%s3 + $0x2] sm:$0x1]
    %v60 = vld [vmem:[#allocation5] sm:$0xff]
    %v61 = vld [vmem:[#allocation5 + $0x8] sm:$0xff]
    %v62 = vld [vmem:[#allocation5 + $0x10] sm:$0xff]
    %v63 = vld [vmem:[#allocation5 + $0x18] sm:$0xff]
    %v64 = vld [vmem:[#allocation5 + $0x20] sm:$0xff]
    %v65 = vld [vmem:[#allocation5 + $0x28] sm:$0xff]
    %v66 = vld [vmem:[#allocation5 + $0x30] sm:$0xff]
    %v67 = vld [vmem:[#allocation5 + $0x38] sm:$0xff]
    %v68 = vld [vmem:[#allocation5 + $0x40] sm:$0xff]
    %v69 = vld [vmem:[#allocation5 + $0x48] sm:$0xff]
    %v70 = vld [vmem:[#allocation5 + $0x50] sm:$0xff]
    %v71 = vld [vmem:[#allocation5 + $0x58] sm:$0xff]
    %v72 = vld [vmem:[#allocation5 + $0x60] sm:$0xff]
    %v73 = vld [vmem:[#allocation5 + $0x68] sm:$0xff]
    %v74 = vld [vmem:[#allocation5 + $0x70] sm:$0xff]
    %v75 = vld [vmem:[#allocation5 + $0x78] sm:$0xff]
    %v76 = vld [vmem:[#allocation5 + $0x80] sm:$0xff]
    %v77 = vld [vmem:[#allocation5 + $0x88] sm:$0xff]
    %v78 = vld [vmem:[#allocation5 + $0x90] sm:$0xff]
    %v79 = vld [vmem:[#allocation5 + $0x98] sm:$0xff]
    %v80 = vld [vmem:[#allocation5 + $0xa0] sm:$0xff]
    %v81 = vld [vmem:[#allocation5 + $0xa8] sm:$0xff]
    %v82 = vld [vmem:[#allocation5 + $0xb0] sm:$0xff]
    %v83 = vld [vmem:[#allocation5 + $0xb8] sm:$0xff]
    %v84 = vld [vmem:[#allocation5 + $0xc0] sm:$0xff]
    %v85 = vld [vmem:[#allocation5 + $0xc8] sm:$0xff]
    %v86 = vld [vmem:[#allocation5 + $0xd0] sm:$0xff]
    %v87 = vld [vmem:[#allocation5 + $0xd8] sm:$0xff]
    %v88 = vld [vmem:[#allocation5 + $0xe0] sm:$0xff]
    %v89 = vld [vmem:[#allocation5 + $0xe8] sm:$0xff]
    %v90 = vld [vmem:[#allocation5 + $0xf0] sm:$0xff]
    %v91 = vld [vmem:[#allocation5 + $0xf8] sm:$0xff]
    %v93 = vlaneseq
    %v94 = vshrl.u32 %v93, 7
    %v95 = vsub.s32 0, %v94
    %v96 = vrot.slane %v58, %v95
    %v97 = vlaneseq
    %v98 = vshrl.u32 %v97, 7
    %v99 = vsub.s32 1, %v98
    %v100 = vrot.slane %v58, %v99
    %103 = vmatprep.subr.mxu0 %v61
    %104 = vmatpush1.msra.mxu0 %v60
    %105 = vmatprep.subr.mxu0 %v63
    %106 = vmatpush1.msra.mxu0 %v62
    %107 = vmatprep.subr.mxu0 %v65
    %108 = vmatpush1.msra.mxu0 %v64
    %109 = vmatprep.subr.mxu0 %v67
    %110 = vmatpush1.msra.mxu0 %v66
    %111 = vmatprep.subr.mxu0 %v69
    %112 = vmatpush1.msra.mxu0 %v68
    %113 = vmatprep.subr.mxu0 %v71
    %114 = vmatpush1.msra.mxu0 %v70
    %115 = vmatprep.subr.mxu0 %v73
    %116 = vmatpush1.msra.mxu0 %v72
    %117 = vmatprep.subr.mxu0 %v75
    %118 = vmatpush1.msra.mxu0 %v74
    %119 = vmatprep.subr.mxu0 %v77
    %120 = vmatpush1.msra.mxu0 %v76
    %121 = vmatprep.subr.mxu0 %v79
    %122 = vmatpush1.msra.mxu0 %v78
    %123 = vmatprep.subr.mxu0 %v81
    %124 = vmatpush1.msra.mxu0 %v80
    %125 = vmatprep.subr.mxu0 %v83
    %126 = vmatpush1.msra.mxu0 %v82
    %127 = vmatprep.subr.mxu0 %v85
    %128 = vmatpush1.msra.mxu0 %v84
    %129 = vmatprep.subr.mxu0 %v87
    %130 = vmatpush1.msra.mxu0 %v86
    %131 = vmatprep.subr.mxu0 %v89
    %132 = vmatpush1.msra.mxu0 %v88
    %133 = vmatprep.subr.mxu0 %v91
    %134 = vmatpush1.msra.mxu0 %v90
    %135 = vmatprep.subr.mxu0 0.0
    %136 = vmatpush1.msra.mxu0 0.0
    %137 = vmatprep.subr.mxu0 0.0
    %138 = vmatpush1.msra.mxu0 0.0
    %139 = vmatprep.subr.mxu0 0.0
    %140 = vmatpush1.msra.mxu0 0.0
    %141 = vmatprep.subr.mxu0 0.0
    %142 = vmatpush1.msra.mxu0 0.0
    %143 = vmatprep.subr.mxu0 0.0
    %144 = vmatpush1.msra.mxu0 0.0
    %145 = vmatprep.subr.mxu0 0.0
    %146 = vmatpush1.msra.mxu0 0.0
    %147 = vmatprep.subr.mxu0 0.0
    %148 = vmatpush1.msra.mxu0 0.0
    %149 = vmatprep.subr.mxu0 0.0
    %150 = vmatpush1.msra.mxu0 0.0
    %151 = vmatprep.subr.mxu0 0.0
    %152 = vmatpush1.msra.mxu0 0.0
    %153 = vmatprep.subr.mxu0 0.0
    %154 = vmatpush1.msra.mxu0 0.0
    %155 = vmatprep.subr.mxu0 0.0
    %156 = vmatpush1.msra.mxu0 0.0
    %157 = vmatprep.subr.mxu0 0.0
    %158 = vmatpush1.msra.mxu0 0.0
    %159 = vmatprep.subr.mxu0 0.0
    %160 = vmatpush1.msra.mxu0 0.0
    %161 = vmatprep.subr.mxu0 0.0
    %162 = vmatpush1.msra.mxu0 0.0
    %163 = vmatprep.subr.mxu0 0.0
    %164 = vmatpush1.msra.mxu0 0.0
    %165 = vmatprep.subr.mxu0 0.0
    %166 = vmatpush1.msra.mxu0 0.0
    %167 = vmatprep.mubr.f32.mxu0 0.0
    %168 = vmatmul.mubr.f32.gmra.mrb[0].mxu0 %v57
    %v169 = vpop.f32.mrb[0].mxu0
    %v170 = vadd.f32 %v96, %v169
    %v171 = vpop.f32.mrb[0].mxu0
    %v172 = vadd.f32 %v100, %v171
    %173 = vdwg.mxu0
    %v174 = vmax.f32 %v170, 0.0
    %v175 = vmax.f32 %v172, 0.0
    %v176 = vld [vmem:[#allocation7] sm:$0xff]
    %v177 = vld [vmem:[#allocation7 + $0x8] sm:$0xff]
    %v178 = vld [vmem:[#allocation7 + $0x10] sm:$0xff]
    %v179 = vld [vmem:[#allocation7 + $0x18] sm:$0xff]
    %v180 = vld [vmem:[#allocation7 + $0x20] sm:$0xff]
    %v181 = vld [vmem:[#allocation7 + $0x28] sm:$0xff]
    %v182 = vld [vmem:[#allocation7 + $0x30] sm:$0xff]
    %v183 = vld [vmem:[#allocation7 + $0x38] sm:$0xff]
    %v184 = vld [vmem:[#allocation7 + $0x40] sm:$0xff]
    %v185 = vld [vmem:[#allocation7 + $0x48] sm:$0xff]
    %v186 = vld [vmem:[#allocation7 + $0x50] sm:$0xff]
    %v187 = vld [vmem:[#allocation7 + $0x58] sm:$0xff]
    %v188 = vld [vmem:[#allocation7 + $0x60] sm:$0xff]
    %v189 = vld [vmem:[#allocation7 + $0x68] sm:$0xff]
    %v190 = vld [vmem:[#allocation7 + $0x70] sm:$0xff]
    %v191 = vld [vmem:[#allocation7 + $0x78] sm:$0xff]
    %v192 = vld [vmem:[#allocation7 + $0x80] sm:$0xff]
    %v193 = vld [vmem:[#allocation7 + $0x88] sm:$0xff]
    %v194 = vld [vmem:[#allocation7 + $0x90] sm:$0xff]
    %v195 = vld [vmem:[#allocation7 + $0x98] sm:$0xff]
    %v196 = vld [vmem:[#allocation7 + $0xa0] sm:$0xff]
    %v197 = vld [vmem:[#allocation7 + $0xa8] sm:$0xff]
    %v198 = vld [vmem:[#allocation7 + $0xb0] sm:$0xff]
    %v199 = vld [vmem:[#allocation7 + $0xb8] sm:$0xff]
    %v200 = vld [vmem:[#allocation7 + $0xc0] sm:$0xff]
    %v201 = vld [vmem:[#allocation7 + $0xc8] sm:$0xff]
    %v202 = vld [vmem:[#allocation7 + $0xd0] sm:$0xff]
    %v203 = vld [vmem:[#allocation7 + $0xd8] sm:$0xff]
    %v204 = vld [vmem:[#allocation7 + $0xe0] sm:$0xff]
    %v205 = vld [vmem:[#allocation7 + $0xe8] sm:$0xff]
    %v206 = vld [vmem:[#allocation7 + $0xf0] sm:$0xff]
    %v207 = vld [vmem:[#allocation7 + $0xf8] sm:$0xff]
    %v209 = vlaneseq
    %v210 = vshrl.u32 %v209, 7
    %v211 = vsub.s32 0, %v210
    %v212 = vrot.slane %v59, %v211
    %214 = vmatprep.subr.mxu0 0.0
    %215 = vmatpush1.msra.mxu0 %v176
    %216 = vmatprep.subr.mxu0 0.0
    %217 = vmatpush1.msra.mxu0 %v177
    %218 = vmatprep.subr.mxu0 0.0
    %219 = vmatpush1.msra.mxu0 %v178
    %220 = vmatprep.subr.mxu0 0.0
    %221 = vmatpush1.msra.mxu0 %v179
    %222 = vmatprep.subr.mxu0 0.0
    %223 = vmatpush1.msra.mxu0 %v180
    %224 = vmatprep.subr.mxu0 0.0
    %225 = vmatpush1.msra.mxu0 %v181
    %226 = vmatprep.subr.mxu0 0.0
    %227 = vmatpush1.msra.mxu0 %v182
    %228 = vmatprep.subr.mxu0 0.0
    %229 = vmatpush1.msra.mxu0 %v183
    %230 = vmatprep.subr.mxu0 0.0
    %231 = vmatpush1.msra.mxu0 %v184
    %232 = vmatprep.subr.mxu0 0.0
    %233 = vmatpush1.msra.mxu0 %v185
    %234 = vmatprep.subr.mxu0 0.0
    %235 = vmatpush1.msra.mxu0 %v186
    %236 = vmatprep.subr.mxu0 0.0
    %237 = vmatpush1.msra.mxu0 %v187
    %238 = vmatprep.subr.mxu0 0.0
    %239 = vmatpush1.msra.mxu0 %v188
    %240 = vmatprep.subr.mxu0 0.0
    %241 = vmatpush1.msra.mxu0 %v189
    %242 = vmatprep.subr.mxu0 0.0
    %243 = vmatpush1.msra.mxu0 %v190
    %244 = vmatprep.subr.mxu0 0.0
    %245 = vmatpush1.msra.mxu0 %v191
    %246 = vmatprep.subr.mxu0 0.0
    %247 = vmatpush1.msra.mxu0 %v192
    %248 = vmatprep.subr.mxu0 0.0
    %249 = vmatpush1.msra.mxu0 %v193
    %250 = vmatprep.subr.mxu0 0.0
    %251 = vmatpush1.msra.mxu0 %v194
    %252 = vmatprep.subr.mxu0 0.0
    %253 = vmatpush1.msra.mxu0 %v195
    %254 = vmatprep.subr.mxu0 0.0
    %255 = vmatpush1.msra.mxu0 %v196
    %256 = vmatprep.subr.mxu0 0.0
    %257 = vmatpush1.msra.mxu0 %v197
    %258 = vmatprep.subr.mxu0 0.0
    %259 = vmatpush1.msra.mxu0 %v198
    %260 = vmatprep.subr.mxu0 0.0
    %261 = vmatpush1.msra.mxu0 %v199
    %262 = vmatprep.subr.mxu0 0.0
    %263 = vmatpush1.msra.mxu0 %v200
    %264 = vmatprep.subr.mxu0 0.0
    %265 = vmatpush1.msra.mxu0 %v201
    %266 = vmatprep.subr.mxu0 0.0
    %267 = vmatpush1.msra.mxu0 %v202
    %268 = vmatprep.subr.mxu0 0.0
    %269 = vmatpush1.msra.mxu0 %v203
    %270 = vmatprep.subr.mxu0 0.0
    %271 = vmatpush1.msra.mxu0 %v204
    %272 = vmatprep.subr.mxu0 0.0
    %273 = vmatpush1.msra.mxu0 %v205
    %274 = vmatprep.subr.mxu0 0.0
    %275 = vmatpush1.msra.mxu0 %v206
    %276 = vmatprep.subr.mxu0 0.0
    %277 = vmatpush1.msra.mxu0 %v207
    %278 = vmatprep.mubr.f32.mxu0 %v175
    %279 = vmatmul.mubr.f32.gmra.mrb[0].mxu0 %v174
    %v280 = vpop.f32.mrb[0].mxu0
    %v281 = vadd.f32 %v212, %v280
    %v282 = vpop.f32.mrb[0].mxu0
    %283 = vdwg.mxu0
    %v284 = vlaneseq
    %v285 = vand.u32 %v284, 127
    %vm286 = vcmp.ge.s32.totalorder %v285, 64
    %v287 = vand.u32 2147483647, %v281
    %v288 = vsel %vm286, %v287, %v281
    %289 = vst [vmem:[#allocation8] sm:$0xff] %v288
    // Predicated region
    $region30: #{tpu_custom_call.1} parent=1 // pred_check
      _
    $region31: #{tpu_custom_call.1} parent=1 // pred_check_branch
      %291 = sbr.rel (0) target = $region33
    $region32: #{tpu_custom_call.1} parent=1 // pred_region
      %s293 = ssub.s32 128, 128
      %294 = vsyncadd [#allocation4], %s293
      %s296 = sshll.u32 [#allocation8], 4
      %s297 = int_to_ptr.vmem [resolvable:$true] %s296
      %299 = dma.vmem_to_hbm [thread:$0]  %s297, 128, %s4, [#allocation4]
    $region33: #{tpu_custom_call.1} parent=1 // pred_fallthru
      _
    // Predicated region
    $region34: #{tpu_custom_call.1} parent=1 // pred_check
      _
    $region35: #{tpu_custom_call.1} parent=1 // pred_check_branch
      %301 = sbr.rel (0) target = $region37
    $region36: #{tpu_custom_call.1} parent=1 // pred_region
      %302 = dma.done [#allocation4], 128
    $region37: #{tpu_custom_call.1} parent=1 // pred_fallthru
      _
    %303 = vsyncpa [#allocation3], 1
    %304 = vsyncpa [#allocation6], 1
    %305 = vsyncpa [#allocation4], 1

</llo_original>
